<compile_context>
chip_gen: v5e
topology: v5e:2x2
jax: 0.10.0
libtpu: 0.0.40
codegen_flags: <defaults>
</compile_context>

<pallas_src>
import jax
import jax.numpy as jnp
from jax.experimental import pallas as pl
from jax.experimental.pallas import tpu as pltpu

LANE = 128
SUBLANE = 8


def _round_up(x: int, m: int) -> int:
    return (x + m - 1) // m * m


# ------------------------------ kernel --------------------------------------
def actor_kernel(x_ref, w1_ref, b1_ref, w2_ref, b2_ref, wmu_ref, bmu_ref, mu_ref):
    # Layer 1: tanh(x @ W1 + b1)    (bias is a (1, H) row; broadcasts over sublanes)
    h1 = jnp.tanh(
        jnp.dot(x_ref[...], w1_ref[...], preferred_element_type=jnp.float32)
        + b1_ref[...]
    )
    # Layer 2: tanh(h1 @ W2 + b2)
    h2 = jnp.tanh(
        jnp.dot(h1, w2_ref[...], preferred_element_type=jnp.float32)
        + b2_ref[...]
    )
    # mu head: full 128-lane-padded matmul (good MXU feed), then a narrow store —
    # only the first n_act lanes ever leave VMEM, so HBM writeback is B*n_act*4 B.
    mu_full = (
        jnp.dot(h2, wmu_ref[...], preferred_element_type=jnp.float32)
        + bmu_ref[...]
    )
    mu_ref[...] = mu_full[:, : mu_ref.shape[-1]]


# ------------------------ one-time parameter prep ----------------------------
def pad_params(params):
    """Pad weights/biases to lane/MXU-friendly shapes ONCE (hoisted out of the
    per-call path). Zero padding preserves the math exactly (tanh(0)=0, zero
    rows/cols contribute 0)."""
    w1, b1, w2, b2, wmu, bmu, logsig = params
    n_in, H = w1.shape
    n_act = wmu.shape[1]
    h_pad = _round_up(H, LANE)
    a_pad = _round_up(n_act, LANE)
    f32 = jnp.float32
    w1p = jnp.zeros((n_in, h_pad), f32).at[:, :H].set(w1.astype(f32))
    b1p = jnp.zeros((1, h_pad), f32).at[:, :H].set(b1.reshape(1, -1).astype(f32))
    w2p = jnp.zeros((h_pad, h_pad), f32).at[:H, :H].set(w2.astype(f32))
    b2p = jnp.zeros((1, h_pad), f32).at[:, :H].set(b2.reshape(1, -1).astype(f32))
    wmup = jnp.zeros((h_pad, a_pad), f32).at[:H, :n_act].set(wmu.astype(f32))
    bmup = jnp.zeros((1, a_pad), f32).at[:, :n_act].set(bmu.reshape(1, -1).astype(f32))
    return (w1p, b1p, w2p, b2p, wmup, bmup, jnp.asarray(logsig, f32))


# ------------------------------- forward -------------------------------------
def actor_forward(obs, padded_params, *, block_b: int = 4096):
    """obs: (B, n_input) float32. padded_params: output of pad_params().
    Returns ((mu, sigma), None) — Actor.forward (continuous, free_log_std=True)."""
    w1p, b1p, w2p, b2p, wmup, bmup, logsig = padded_params
    B, n_in = obs.shape
    n_act = logsig.shape[0]
    h_pad = w1p.shape[1]
    a_pad = wmup.shape[1]

    # ---- batch tile selection -------------------------------------------
    if B <= SUBLANE:
        tb = B                                 # single tile, block == full array dims
    else:
        cap = max(SUBLANE, (block_b // SUBLANE) * SUBLANE)
        tb = min(cap, _round_up(B, SUBLANE))
        # keep >= 2 grid steps so the "parallel" axis can shard over v7x's 2 TCs
        tb = min(tb, _round_up(pl.cdiv(B, 2), SUBLANE))
        tb = max(tb, SUBLANE)
    grid = (pl.cdiv(B, tb),)                   # ragged last tile handled by Pallas
                                               # (OOB rows are independent & masked)

    const2d = lambda i: (0, 0)  # weights/biases: same block each step -> VMEM-resident

    mu = pl.pallas_call(
        actor_kernel,
        out_shape=jax.ShapeDtypeStruct((B, n_act), jnp.float32),
        grid=grid,
        in_specs=[
            pl.BlockSpec((tb, n_in), lambda i: (i, 0)),     # obs tile (streams)
            pl.BlockSpec((n_in, h_pad), const2d),           # W1
            pl.BlockSpec((1, h_pad), const2d),              # b1
            pl.BlockSpec((h_pad, h_pad), const2d),          # W2
            pl.BlockSpec((1, h_pad), const2d),              # b2
            pl.BlockSpec((h_pad, a_pad), const2d),          # Wmu (lane-padded)
            pl.BlockSpec((1, a_pad), const2d),              # bmu
        ],
        out_specs=pl.BlockSpec((tb, n_act), lambda i: (i, 0)),  # narrow mu writeback
        compiler_params=pltpu.CompilerParams(
            dimension_semantics=("parallel",),              # batch grid -> 2 TCs on v7x
            vmem_limit_bytes=48 * 1024 * 1024,              # large tiles need > default
        ),
    )(obs.astype(jnp.float32), w1p, b1p, w2p, b2p, wmup, bmup)

    # sigma head (free_log_std=True) is data-independent: computed in the wrapper.
    # Reproduces torch's `self.sigma.expand(mu.shape).exp()` exactly, including the
    # (n_act, 1) -> (B, n_act) broadcast quirk.
    if not (n_act == B or n_act == 1):
        raise ValueError(
            f"sigma parameter of shape ({n_act}, 1) cannot expand to mu shape "
            f"({B}, {n_act}); the original torch module only supports n_act == "
            f"batch or n_act == 1 with free_log_std=True."
        )
    sigma = jnp.exp(jnp.broadcast_to(logsig, mu.shape))
    return (mu, sigma), None


# ------------------------------ init ----------------------------------------
def init_params(key, n_input, n_hidden, n_act):
    """Deterministic init matching PyTorch Linear shapes (weights stored (in, out))."""
    def linear(k, fan_in, fan_out):
        bound = 1.0 / jnp.sqrt(jnp.float32(fan_in))
        kw, kb = jax.random.split(k)
        w = jax.random.uniform(kw, (fan_in, fan_out), jnp.float32, -bound, bound)
        b = jax.random.uniform(kb, (1, fan_out), jnp.float32, -bound, bound)
        return w, b

    k1, k2, k3 = jax.random.split(key, 3)
    w1, b1 = linear(k1, n_input, n_hidden)
    w2, b2 = linear(k2, n_hidden, n_hidden)
    wmu, bmu = linear(k3, n_hidden, n_act)
    # self.sigma = nn.Parameter(torch.zeros(n_output, 1))
    logsig = jnp.zeros((n_act, 1), jnp.float32)
    return (w1, b1, w2, b2, wmu, bmu, logsig)


if __name__ == "__main__":
    key = jax.random.PRNGKey(0)

    # --- check 1: small shapes consistent with the module (B == n_act, sigma quirk)
    B, n_input, n_hidden, n_act = 2, 16, 64, 2
    kp, kx = jax.random.split(key)
    params = init_params(kp, n_input, n_hidden, n_act)
    padded = pad_params(params)          # one-time prep (hoisted out of forward)
    obs = jax.random.normal(kx, (B, n_input), jnp.float32)

    (mu, sigma), state = actor_forward(obs, padded)
    jax.block_until_ready((mu, sigma))

    w1, b1, w2, b2, wmu, bmu, logsig = params
    h = jnp.tanh(obs @ w1 + b1)
    h = jnp.tanh(h @ w2 + b2)
    mu_ref = h @ wmu + bmu
    sigma_ref = jnp.exp(jnp.broadcast_to(logsig, mu_ref.shape))
    assert mu.shape == (B, n_act) and sigma.shape == (B, n_act)
    assert jnp.allclose(mu, mu_ref, atol=1e-5), "mu mismatch"
    assert jnp.allclose(sigma, sigma_ref, atol=1e-6), "sigma mismatch"
    assert state is None

    # --- check 2: multi-step grid with a ragged last tile (B=20, tb=16) to
    # exercise the OOB-masked path and the 2-TC "parallel" split.
    B2 = n_act2 = 20
    kp2, kx2 = jax.random.split(jax.random.PRNGKey(1))
    params2 = init_params(kp2, n_input, n_hidden, n_act2)
    padded2 = pad_params(params2)
    obs2 = jax.random.normal(kx2, (B2, n_input), jnp.float32)
    (mu2, sigma2), _ = actor_forward(obs2, padded2, block_b=16)
    jax.block_until_ready((mu2, sigma2))

    w1, b1, w2, b2, wmu, bmu, logsig = params2
    h2r = jnp.tanh(obs2 @ w1 + b1)
    h2r = jnp.tanh(h2r @ w2 + b2)
    mu2_ref = h2r @ wmu + bmu
    assert jnp.allclose(mu2, mu2_ref, atol=1e-5), "mu mismatch (tiled path)"
    assert jnp.allclose(
        sigma2, jnp.exp(jnp.broadcast_to(logsig, mu2_ref.shape)), atol=1e-6
    ), "sigma mismatch (tiled path)"

    print("KERNEL_OK")
</pallas_src>

<mosaic_0001>
module attributes {stable_mosaic.version = 11 : i64} {
  func.func @actor_kernel(%arg0: i32, %arg1: memref<2x16xf32, #tpu.memory_space<vmem>>, %arg2: memref<16x128xf32, #tpu.memory_space<vmem>>, %arg3: memref<1x128xf32, #tpu.memory_space<vmem>>, %arg4: memref<128x128xf32, #tpu.memory_space<vmem>>, %arg5: memref<1x128xf32, #tpu.memory_space<vmem>>, %arg6: memref<128x128xf32, #tpu.memory_space<vmem>>, %arg7: memref<1x128xf32, #tpu.memory_space<vmem>>, %arg8: memref<2x2xf32, #tpu.memory_space<vmem>>) attributes {dimension_semantics = [#tpu.dimension_semantics<parallel>], iteration_bounds = array<i64: 1>, scalar_prefetch = 0 : i64, scratch_operands = 0 : i64, tpu.core_type = #tpu.core_type<tc>, window_params = [{transform_indices = @transform_0, window_bounds = array<i64: 2, 16>}, {pipeline_mode = #tpu.pipeline_mode<synchronous>, transform_indices = @transform_1, window_bounds = array<i64: 16, 128>}, {pipeline_mode = #tpu.pipeline_mode<synchronous>, transform_indices = @transform_2, window_bounds = array<i64: 1, 128>}, {pipeline_mode = #tpu.pipeline_mode<synchronous>, transform_indices = @transform_3, window_bounds = array<i64: 128, 128>}, {pipeline_mode = #tpu.pipeline_mode<synchronous>, transform_indices = @transform_4, window_bounds = array<i64: 1, 128>}, {pipeline_mode = #tpu.pipeline_mode<synchronous>, transform_indices = @transform_5, window_bounds = array<i64: 128, 128>}, {pipeline_mode = #tpu.pipeline_mode<synchronous>, transform_indices = @transform_6, window_bounds = array<i64: 1, 128>}, {transform_indices = @transform_7, window_bounds = array<i64: 2, 2>}]} {
    %c0 = arith.constant 0 : index
    %c0_0 = arith.constant 0 : index
    %0 = vector.load %arg1[%c0, %c0_0] : memref<2x16xf32, #tpu.memory_space<vmem>>, vector<2x16xf32>
    %c0_1 = arith.constant 0 : index
    %c0_2 = arith.constant 0 : index
    %1 = vector.load %arg2[%c0_1, %c0_2] : memref<16x128xf32, #tpu.memory_space<vmem>>, vector<16x128xf32>
    %cst = arith.constant dense<0.000000e+00> : vector<2x128xf32>
    %2 = tpu.matmul %0, %1, %cst {dimension_numbers = #tpu.dot_dimension_numbers<[1], [0], [0], [1], [0, 0, 1, 1], [], []>} : vector<2x16xf32>, vector<16x128xf32>, vector<2x128xf32> -> vector<2x128xf32>
    %c0_3 = arith.constant 0 : index
    %c0_4 = arith.constant 0 : index
    %3 = vector.load %arg3[%c0_3, %c0_4] : memref<1x128xf32, #tpu.memory_space<vmem>>, vector<1x128xf32>
    %4 = vector.broadcast %3 : vector<1x128xf32> to vector<2x128xf32>
    %5 = arith.addf %2, %4 : vector<2x128xf32>
    %6 = math.tanh %5 : vector<2x128xf32>
    %c0_5 = arith.constant 0 : index
    %c0_6 = arith.constant 0 : index
    %7 = vector.load %arg4[%c0_5, %c0_6] : memref<128x128xf32, #tpu.memory_space<vmem>>, vector<128x128xf32>
    %cst_7 = arith.constant dense<0.000000e+00> : vector<2x128xf32>
    %8 = tpu.matmul %6, %7, %cst_7 {dimension_numbers = #tpu.dot_dimension_numbers<[1], [0], [0], [1], [0, 0, 1, 1], [], []>} : vector<2x128xf32>, vector<128x128xf32>, vector<2x128xf32> -> vector<2x128xf32>
    %c0_8 = arith.constant 0 : index
    %c0_9 = arith.constant 0 : index
    %9 = vector.load %arg5[%c0_8, %c0_9] : memref<1x128xf32, #tpu.memory_space<vmem>>, vector<1x128xf32>
    %10 = vector.broadcast %9 : vector<1x128xf32> to vector<2x128xf32>
    %11 = arith.addf %8, %10 : vector<2x128xf32>
    %12 = math.tanh %11 : vector<2x128xf32>
    %c0_10 = arith.constant 0 : index
    %c0_11 = arith.constant 0 : index
    %13 = vector.load %arg6[%c0_10, %c0_11] : memref<128x128xf32, #tpu.memory_space<vmem>>, vector<128x128xf32>
    %cst_12 = arith.constant dense<0.000000e+00> : vector<2x128xf32>
    %14 = tpu.matmul %12, %13, %cst_12 {dimension_numbers = #tpu.dot_dimension_numbers<[1], [0], [0], [1], [0, 0, 1, 1], [], []>} : vector<2x128xf32>, vector<128x128xf32>, vector<2x128xf32> -> vector<2x128xf32>
    %c0_13 = arith.constant 0 : index
    %c0_14 = arith.constant 0 : index
    %15 = vector.load %arg7[%c0_13, %c0_14] : memref<1x128xf32, #tpu.memory_space<vmem>>, vector<1x128xf32>
    %16 = vector.broadcast %15 : vector<1x128xf32> to vector<2x128xf32>
    %17 = arith.addf %14, %16 : vector<2x128xf32>
    %18 = vector.extract_strided_slice %17 {offsets = [0, 0], sizes = [2, 2], strides = [1, 1]} : vector<2x128xf32> to vector<2x2xf32>
    %c0_15 = arith.constant 0 : index
    %c0_16 = arith.constant 0 : index
    %19 = vector.load %arg8[%c0_15, %c0_16] : memref<2x2xf32, #tpu.memory_space<vmem>>, vector<2x2xf32>
    tpu.vector_store %arg8[%c0_15, %c0_16], %18 {strides = array<i32>} : memref<2x2xf32, #tpu.memory_space<vmem>>, vector<2x2xf32>,
    return
  }
  func.func @transform_0(%arg0: i32) -> (i32, i32) {
    %c0_i32 = arith.constant 0 : i32
    %c0_i32_0 = arith.constant 0 : i32
    return %arg0, %c0_i32 : i32, i32
  }
  func.func @transform_1(%arg0: i32) -> (i32, i32) {
    %c0_i32 = arith.constant 0 : i32
    %c0_i32_0 = arith.constant 0 : i32
    %c0_i32_1 = arith.constant 0 : i32
    return %c0_i32, %c0_i32_0 : i32, i32
  }
  func.func @transform_2(%arg0: i32) -> (i32, i32) {
    %c0_i32 = arith.constant 0 : i32
    %c0_i32_0 = arith.constant 0 : i32
    %c0_i32_1 = arith.constant 0 : i32
    return %c0_i32, %c0_i32_0 : i32, i32
  }
  func.func @transform_3(%arg0: i32) -> (i32, i32) {
    %c0_i32 = arith.constant 0 : i32
    %c0_i32_0 = arith.constant 0 : i32
    %c0_i32_1 = arith.constant 0 : i32
    return %c0_i32, %c0_i32_0 : i32, i32
  }
  func.func @transform_4(%arg0: i32) -> (i32, i32) {
    %c0_i32 = arith.constant 0 : i32
    %c0_i32_0 = arith.constant 0 : i32
    %c0_i32_1 = arith.constant 0 : i32
    return %c0_i32, %c0_i32_0 : i32, i32
  }
  func.func @transform_5(%arg0: i32) -> (i32, i32) {
    %c0_i32 = arith.constant 0 : i32
    %c0_i32_0 = arith.constant 0 : i32
    %c0_i32_1 = arith.constant 0 : i32
    return %c0_i32, %c0_i32_0 : i32, i32
  }
  func.func @transform_6(%arg0: i32) -> (i32, i32) {
    %c0_i32 = arith.constant 0 : i32
    %c0_i32_0 = arith.constant 0 : i32
    %c0_i32_1 = arith.constant 0 : i32
    return %c0_i32, %c0_i32_0 : i32, i32
  }
  func.func @transform_7(%arg0: i32) -> (i32, i32) {
    %c0_i32 = arith.constant 0 : i32
    %c0_i32_0 = arith.constant 0 : i32
    return %arg0, %c0_i32 : i32, i32
  }
}

</mosaic_0001>

<llo_original>
// kernel: tpu_custom_call.1
$region0: #{tpu_custom_call.1}
  #allocation0 [shape = 'u32[]', space=smem, size = 0x4, offset = 0x4, fixed_abs, tag = 'smem constant byte address 0x4 - core index']
  #allocation1 [shape = 'u32[72,128]{1,0:T(1,128)}', space=vmem, size = 0x9000, scoped, tag = 'internal scratch']
  %s0 = inlined_call_operand.hbm [shape: f32[2,16], index: 0, kind: input, shape index: {}]
  %s1 = inlined_call_operand.hbm [shape: f32[16,128], index: 1, kind: input, shape index: {}]
  %s2 = inlined_call_operand.vmem [shape: f32[1,128], index: 2, kind: input, shape index: {}]
  %s3 = inlined_call_operand.hbm [shape: f32[128,128], index: 3, kind: input, shape index: {}]
  %s4 = inlined_call_operand.vmem [shape: f32[1,128], index: 4, kind: input, shape index: {}]
  %s5 = inlined_call_operand.hbm [shape: f32[128,128], index: 5, kind: input, shape index: {}]
  %s6 = inlined_call_operand.vmem [shape: f32[1,128], index: 6, kind: input, shape index: {}]
  %s7 = inlined_call_operand.hbm [shape: f32[2,2], index: 7, kind: output, shape index: {}]
  %s8 = sld [smem:[#allocation0]]
  $region54: #{tpu_custom_call.1} parent=0
    _
  %s10 = ssub.s32 1, %s8
  %s11 = scalar_select 0, %s10, %s8
  $region1: #{tpu_custom_call.1} parent=0
    #allocation2 [shape = 'u8[1024]{0}', space=vmem, size = 0x400, scoped, tag = 'input window, operand 0, single buffered']
    #allocation3 [shape = 's32[1]{0}', space=sflag, size = 0x4, scoped, tag = 'scoped memory for tpu_custom_call.1']
    #allocation4 [shape = 's32[1]{0}', space=sflag, size = 0x4, scoped, tag = 'scoped memory for tpu_custom_call.1']
    #allocation5 [shape = 'u8[8192]{0}', space=vmem, size = 0x2000, scoped, tag = 'input window, operand 1, single buffered']
    #allocation6 [shape = 's32[1]{0}', space=sflag, size = 0x4, scoped, tag = 'scoped memory for tpu_custom_call.1']
    #allocation7 [shape = 'u8[65536]{0}', space=vmem, size = 0x10000, scoped, tag = 'input window, operand 3, single buffered']
    #allocation8 [shape = 'u8[65536]{0}', space=vmem, size = 0x10000, scoped, tag = 'input window, operand 5, single buffered']
    #allocation9 [shape = 's32[1]{0}', space=sflag, size = 0x4, scoped, tag = 'scoped memory for tpu_custom_call.1']
    #allocation10 [shape = 'u8[1024]{0}', space=vmem, size = 0x400, scoped, tag = 'output window, operand 0, single buffered']
    %12 = vsyncpa [#allocation3], 0
    %13 = vsyncpa [#allocation6], 0
    %14 = vsyncpa [#allocation9], 0
    %15 = vsyncpa [#allocation4], 0
    // Predicated region
    $region2: #{tpu_custom_call.1} parent=1 // pred_check
      _
    $region3: #{tpu_custom_call.1} parent=1 // pred_check_branch
      %17 = sbr.rel (0) target = $region5
    $region4: #{tpu_custom_call.1} parent=1 // pred_region
      %19 = vsyncadd [#allocation3], 0
      %s21 = sshll.u32 %s0, 4
      %s22 = int_to_ptr.hbm [resolvable:$true] %s21
      %s23 = sshll.u32 [#allocation2], 4
      %s24 = int_to_ptr.vmem [resolvable:$true] %s23
      %26 = dma.hbm_to_vmem [thread:$0]  %s22, 32, %s24, [#allocation3]
    $region5: #{tpu_custom_call.1} parent=1 // pred_fallthru
      _
    // Predicated region
    $region6: #{tpu_custom_call.1} parent=1 // pred_check
      _
    $region7: #{tpu_custom_call.1} parent=1 // pred_check_branch
      %28 = sbr.rel (0) target = $region9
    $region8: #{tpu_custom_call.1} parent=1 // pred_region
      %30 = vsyncadd [#allocation6], 0
      %s31 = sshll.u32 %s1, 4
      %s32 = int_to_ptr.hbm [resolvable:$true] %s31
      %s33 = sshll.u32 [#allocation5], 4
      %s34 = int_to_ptr.vmem [resolvable:$true] %s33
      %39 = dma.hbm_to_vmem [thread:$0]  %s32, 256, %s34, [#allocation6], 128, 128, 8
    $region9: #{tpu_custom_call.1} parent=1 // pred_fallthru
      _
    // Predicated region
    $region10: #{tpu_custom_call.1} parent=1 // pred_check
      _
    $region11: #{tpu_custom_call.1} parent=1 // pred_check_branch
      %41 = sbr.rel (0) target = $region13
    $region12: #{tpu_custom_call.1} parent=1 // pred_region
      _
    $region13: #{tpu_custom_call.1} parent=1 // pred_fallthru
      _
    // Predicated region
    $region14: #{tpu_custom_call.1} parent=1 // pred_check
      _
    $region15: #{tpu_custom_call.1} parent=1 // pred_check_branch
      %43 = sbr.rel (0) target = $region17
    $region16: #{tpu_custom_call.1} parent=1 // pred_region
      %45 = vsyncadd [#allocation6], 0
      %s46 = sshll.u32 %s3, 4
      %s47 = int_to_ptr.hbm [resolvable:$true] %s46
      %s48 = sshll.u32 [#allocation7], 4
      %s49 = int_to_ptr.vmem [resolvable:$true] %s48
      %54 = dma.hbm_to_vmem [thread:$0]  %s47, 2048, %s49, [#allocation6], 128, 128, 8
    $region17: #{tpu_custom_call.1} parent=1 // pred_fallthru
      _
    // Predicated region
    $region18: #{tpu_custom_call.1} parent=1 // pred_check
      _
    $region19: #{tpu_custom_call.1} parent=1 // pred_check_branch
      %56 = sbr.rel (0) target = $region21
    $region20: #{tpu_custom_call.1} parent=1 // pred_region
      _
    $region21: #{tpu_custom_call.1} parent=1 // pred_fallthru
      _
    // Predicated region
    $region22: #{tpu_custom_call.1} parent=1 // pred_check
      _
    $region23: #{tpu_custom_call.1} parent=1 // pred_check_branch
      %58 = sbr.rel (0) target = $region25
    $region24: #{tpu_custom_call.1} parent=1 // pred_region
      %60 = vsyncadd [#allocation9], 0
      %s61 = sshll.u32 %s5, 4
      %s62 = int_to_ptr.hbm [resolvable:$true] %s61
      %s63 = sshll.u32 [#allocation8], 4
      %s64 = int_to_ptr.vmem [resolvable:$true] %s63
      %69 = dma.hbm_to_vmem [thread:$0]  %s62, 2048, %s64, [#allocation9], 128, 128, 8
    $region25: #{tpu_custom_call.1} parent=1 // pred_fallthru
      _
    // Predicated region
    $region26: #{tpu_custom_call.1} parent=1 // pred_check
      _
    $region27: #{tpu_custom_call.1} parent=1 // pred_check_branch
      %71 = sbr.rel (0) target = $region29
    $region28: #{tpu_custom_call.1} parent=1 // pred_region
      _
    $region29: #{tpu_custom_call.1} parent=1 // pred_fallthru
      _
    // Predicated region
    $region30: #{tpu_custom_call.1} parent=1 // pred_check
      _
    $region31: #{tpu_custom_call.1} parent=1 // pred_check_branch
      %73 = sbr.rel (0) target = $region33
    $region32: #{tpu_custom_call.1} parent=1 // pred_region
      %75 = dma.done [#allocation3], 32
    $region33: #{tpu_custom_call.1} parent=1 // pred_fallthru
      _
    // Predicated region
    $region34: #{tpu_custom_call.1} parent=1 // pred_check
      _
    $region35: #{tpu_custom_call.1} parent=1 // pred_check_branch
      %77 = sbr.rel (0) target = $region37
    $region36: #{tpu_custom_call.1} parent=1 // pred_region
      %79 = dma.done [#allocation6], 256
    $region37: #{tpu_custom_call.1} parent=1 // pred_fallthru
      _
    // Predicated region
    $region38: #{tpu_custom_call.1} parent=1 // pred_check
      _
    $region39: #{tpu_custom_call.1} parent=1 // pred_check_branch
      %81 = sbr.rel (0) target = $region41
    $region40: #{tpu_custom_call.1} parent=1 // pred_region
      %83 = dma.done [#allocation6], 2048
    $region41: #{tpu_custom_call.1} parent=1 // pred_fallthru
      _
    // Predicated region
    $region42: #{tpu_custom_call.1} parent=1 // pred_check
      _
    $region43: #{tpu_custom_call.1} parent=1 // pred_check_branch
      %85 = sbr.rel (0) target = $region45
    $region44: #{tpu_custom_call.1} parent=1 // pred_region
      %87 = dma.done [#allocation9], 2048
    $region45: #{tpu_custom_call.1} parent=1 // pred_fallthru
      _
    %v88 = vld [vmem:[#allocation2] sm:$0x3]
    %v89 = vld [vmem:[#allocation5] sm:$0xff]
    %v90 = vld [vmem:[#allocation5 + $0x8] sm:$0xff]
    %v91 = vld [vmem:[%s2] sm:$0x1]
    %v93 = vperm.slane %v91, 0
    %vm95 = vcmask 130048
    %v97 = vsel %vm95, %v88, 0
    %99 = vmatpush.msra.mxu0 0.0
    %100 = vmatpush.msra.mxu0 0.0
    %101 = vmatpush.msra.mxu0 0.0
    %102 = vmatpush.msra.mxu0 0.0
    %103 = vmatpush.msra.mxu0 0.0
    %104 = vmatpush.msra.mxu0 0.0
    %105 = vmatpush.msra.mxu0 0.0
    %106 = vmatpush.msra.mxu0 0.0
    %107 = vmatpush.msra.mxu0 0.0
    %108 = vmatpush.msra.mxu0 0.0
    %109 = vmatpush.msra.mxu0 0.0
    %110 = vmatpush.msra.mxu0 0.0
    %111 = vmatpush.msra.mxu0 0.0
    %112 = vmatpush.msra.mxu0 0.0
    %113 = vmatpush.msra.mxu0 %v90
    %114 = vmatpush.msra.mxu0 %v89
    %115 = vmatmul.f32.gmra.mxu0 %v97
    %v116 = vpop.f32.mrf.mxu0
    %v117 = vadd.f32 %v93, %v116
    %118 = vdwg.mxu0
    %v119 = vtanh.pop %v117
    %v120 = vld [vmem:[#allocation7] sm:$0xff]
    %v121 = vld [vmem:[#allocation7 + $0x8] sm:$0xff]
    %v122 = vld [vmem:[#allocation7 + $0x10] sm:$0xff]
    %v123 = vld [vmem:[#allocation7 + $0x18] sm:$0xff]
    %v124 = vld [vmem:[#allocation7 + $0x20] sm:$0xff]
    %v125 = vld [vmem:[#allocation7 + $0x28] sm:$0xff]
    %v126 = vld [vmem:[#allocation7 + $0x30] sm:$0xff]
    %v127 = vld [vmem:[#allocation7 + $0x38] sm:$0xff]
    %v128 = vld [vmem:[#allocation7 + $0x40] sm:$0xff]
    %v129 = vld [vmem:[#allocation7 + $0x48] sm:$0xff]
    %v130 = vld [vmem:[#allocation7 + $0x50] sm:$0xff]
    %v131 = vld [vmem:[#allocation7 + $0x58] sm:$0xff]
    %v132 = vld [vmem:[#allocation7 + $0x60] sm:$0xff]
    %v133 = vld [vmem:[#allocation7 + $0x68] sm:$0xff]
    %v134 = vld [vmem:[#allocation7 + $0x70] sm:$0xff]
    %v135 = vld [vmem:[#allocation7 + $0x78] sm:$0xff]
    %v136 = vld [vmem:[%s4] sm:$0x1]
    %v138 = vperm.slane %v136, 0
    %140 = vmatpush.msra.mxu0 %v135
    %141 = vmatpush.msra.mxu0 %v134
    %142 = vmatpush.msra.mxu0 %v133
    %143 = vmatpush.msra.mxu0 %v132
    %144 = vmatpush.msra.mxu0 %v131
    %145 = vmatpush.msra.mxu0 %v130
    %146 = vmatpush.msra.mxu0 %v129
    %147 = vmatpush.msra.mxu0 %v128
    %148 = vmatpush.msra.mxu0 %v127
    %149 = vmatpush.msra.mxu0 %v126
    %150 = vmatpush.msra.mxu0 %v125
    %151 = vmatpush.msra.mxu0 %v124
    %152 = vmatpush.msra.mxu0 %v123
    %153 = vmatpush.msra.mxu0 %v122
    %154 = vmatpush.msra.mxu0 %v121
    %155 = vmatpush.msra.mxu0 %v120
    %156 = vmatmul.f32.gmra.mxu0 %v119
    %v157 = vpop.f32.mrf.mxu0
    %v158 = vadd.f32 %v138, %v157
    %159 = vdwg.mxu0
    %v160 = vtanh.pop %v158
    %v161 = vld [vmem:[#allocation8] sm:$0xff]
    %v162 = vld [vmem:[#allocation8 + $0x8] sm:$0xff]
    %v163 = vld [vmem:[#allocation8 + $0x10] sm:$0xff]
    %v164 = vld [vmem:[#allocation8 + $0x18] sm:$0xff]
    %v165 = vld [vmem:[#allocation8 + $0x20] sm:$0xff]
    %v166 = vld [vmem:[#allocation8 + $0x28] sm:$0xff]
    %v167 = vld [vmem:[#allocation8 + $0x30] sm:$0xff]
    %v168 = vld [vmem:[#allocation8 + $0x38] sm:$0xff]
    %v169 = vld [vmem:[#allocation8 + $0x40] sm:$0xff]
    %v170 = vld [vmem:[#allocation8 + $0x48] sm:$0xff]
    %v171 = vld [vmem:[#allocation8 + $0x50] sm:$0xff]
    %v172 = vld [vmem:[#allocation8 + $0x58] sm:$0xff]
    %v173 = vld [vmem:[#allocation8 + $0x60] sm:$0xff]
    %v174 = vld [vmem:[#allocation8 + $0x68] sm:$0xff]
    %v175 = vld [vmem:[#allocation8 + $0x70] sm:$0xff]
    %v176 = vld [vmem:[#allocation8 + $0x78] sm:$0xff]
    %v177 = vld [vmem:[%s6] sm:$0x1]
    %v179 = vperm.slane %v177, 0
    %181 = vmatpush.msra.mxu0 %v176
    %182 = vmatpush.msra.mxu0 %v175
    %183 = vmatpush.msra.mxu0 %v174
    %184 = vmatpush.msra.mxu0 %v173
    %185 = vmatpush.msra.mxu0 %v172
    %186 = vmatpush.msra.mxu0 %v171
    %187 = vmatpush.msra.mxu0 %v170
    %188 = vmatpush.msra.mxu0 %v169
    %189 = vmatpush.msra.mxu0 %v168
    %190 = vmatpush.msra.mxu0 %v167
    %191 = vmatpush.msra.mxu0 %v166
    %192 = vmatpush.msra.mxu0 %v165
    %193 = vmatpush.msra.mxu0 %v164
    %194 = vmatpush.msra.mxu0 %v163
    %195 = vmatpush.msra.mxu0 %v162
    %196 = vmatpush.msra.mxu0 %v161
    %197 = vmatmul.f32.gmra.mxu0 %v160
    %v198 = vpop.f32.mrf.mxu0
    %v199 = vadd.f32 %v179, %v198
    %200 = vdwg.mxu0
    %vm201 = vcmask 9216
    %202 = vst.msk [vmem:[#allocation10] sm:$0x3] %vm201, %v199
    // Predicated region
    $region46: #{tpu_custom_call.1} parent=1 // pred_check
      _
    $region47: #{tpu_custom_call.1} parent=1 // pred_check_branch
      %204 = sbr.rel (0) target = $region49
    $region48: #{tpu_custom_call.1} parent=1 // pred_region
      %206 = vsyncadd [#allocation4], 0
      %s208 = sshll.u32 [#allocation10], 4
      %s209 = int_to_ptr.vmem [resolvable:$true] %s208
      %s210 = sshll.u32 %s7, 4
      %s211 = int_to_ptr.hbm [resolvable:$true] %s210
      %213 = dma.vmem_to_hbm [thread:$0]  %s209, 32, %s211, [#allocation4]
    $region49: #{tpu_custom_call.1} parent=1 // pred_fallthru
      _
    // Predicated region
    $region50: #{tpu_custom_call.1} parent=1 // pred_check
      _
    $region51: #{tpu_custom_call.1} parent=1 // pred_check_branch
      %215 = sbr.rel (0) target = $region53
    $region52: #{tpu_custom_call.1} parent=1 // pred_region
      %217 = dma.done [#allocation4], 32
    $region53: #{tpu_custom_call.1} parent=1 // pred_fallthru
      _
    %218 = vsyncpa [#allocation3], 1
    %219 = vsyncpa [#allocation6], 1
    %220 = vsyncpa [#allocation9], 1
    %221 = vsyncpa [#allocation4], 1

</llo_original>
